<compile_context>
chip_gen: v6e
topology: v6e:2x2x1
jax: 0.10.0
libtpu: 0.0.40
codegen_flags: <defaults>
</compile_context>

<pallas_src>
import functools

import jax
import jax.numpy as jnp
from jax import lax
from jax.experimental import pallas as pl
from jax.experimental.pallas import tpu as pltpu


_DEFAULT_TILE_BUDGET = 24 << 20   # bytes for all double-buffered tiles (v7x-safe)
_DEFAULT_VMEM_LIMIT = 32 << 20
_MIN_SPLIT_BYTES = 128 * 1024     # only force a multi-block grid above this size


def _vmem_budgets():
    """Generation-tuned VMEM knobs; conservative defaults if no TPU is visible."""
    tile_budget, limit = _DEFAULT_TILE_BUDGET, _DEFAULT_VMEM_LIMIT
    try:
        if jax.devices()[0].platform == "tpu":
            cap = pltpu.get_tpu_info().vmem_capacity_bytes
            if cap >= (128 << 20):          # v5e / v6e: 128 MiB physical VMEM
                tile_budget, limit = 48 << 20, 64 << 20
    except Exception:
        pass
    return tile_budget, limit


def _sublane_multiple(itemsize):
    # Packed dtypes fill sublanes in groups: f32 -> 8, bf16 -> 16, int8/fp8 -> 32.
    return max(8, 8 * (4 // itemsize))


# --------------------------------------------------------------------------- #
# Kernels
# --------------------------------------------------------------------------- #
def _add_kernel(x_ref, pe_ref, o_ref):
    # Native-dtype add; pe (leading block dim 1) broadcasts over the batch rows.
    o_ref[...] = x_ref[...] + pe_ref[...]


def _keep_mask(flat_idx_i32, seed_u32, threshold):
    # murmur3 fmix32 of (global element index ^ mixed seed).
    # Tiling-independent, deterministic dropout mask.  P(keep) = 1 - rate.
    z = flat_idx_i32.astype(jnp.uint32) ^ (seed_u32 * jnp.uint32(0x9E3779B9))
    z = (z ^ (z >> jnp.uint32(16))) * jnp.uint32(0x85EBCA6B)
    z = (z ^ (z >> jnp.uint32(13))) * jnp.uint32(0xC2B2AE35)
    z = z ^ (z >> jnp.uint32(16))
    return z >= jnp.uint32(threshold)


def _add_dropout_kernel_3d(seed_ref, x_ref, pe_ref, o_ref, *, T, D, threshold, scale):
    tB, tT, Dd = x_ref.shape
    t = pl.program_id(0)
    b = pl.program_id(1)
    shape = (tB, tT, Dd)
    bi = lax.broadcasted_iota(jnp.int32, shape, 0) + b * tB
    ti = lax.broadcasted_iota(jnp.int32, shape, 1) + t * tT
    di = lax.broadcasted_iota(jnp.int32, shape, 2)
    flat = (bi * T + ti) * D + di
    keep = _keep_mask(flat, seed_ref[0].astype(jnp.uint32), threshold)
    y = x_ref[...] + pe_ref[...]                       # native dtype
    o_ref[...] = jnp.where(keep, y * jnp.asarray(scale, y.dtype),
                           jnp.zeros((), y.dtype))


def _add_dropout_kernel_2d(seed_ref, x_ref, pe_ref, o_ref, *, L, threshold, scale):
    nb, tL = x_ref.shape
    l = pl.program_id(0)
    bi = lax.broadcasted_iota(jnp.int32, (nb, tL), 0)
    li = lax.broadcasted_iota(jnp.int32, (nb, tL), 1) + l * tL
    flat = bi * L + li                                  # same flat index as 3D path
    keep = _keep_mask(flat, seed_ref[0].astype(jnp.uint32), threshold)
    y = x_ref[...] + pe_ref[...]
    o_ref[...] = jnp.where(keep, y * jnp.asarray(scale, y.dtype),
                           jnp.zeros((), y.dtype))


# --------------------------------------------------------------------------- #
# Tile selection
# --------------------------------------------------------------------------- #
def _choose_tiles_3d(B, T, D, itemsize, budget, sub):
    """Pick (tB, tT) for blocks (tB, tT, D) / pe (1, tT, D), double-buffered."""
    row_bytes = D * itemsize
    max_rows = max(1, budget // (6 * row_bytes))        # x + out + pe, 2 buffers each
    if T <= max_rows:
        tT = T
    else:
        tT = max(sub, (max_rows // sub) * sub)
        for cand in range(tT, sub - 1, -sub):            # prefer a divisor of T
            if T % cand == 0:
                tT = cand
                break
    tile_bytes = tT * row_bytes
    tB = max(1, int((budget - 2 * tile_bytes) // (4 * tile_bytes)))
    tB = min(tB, B)
    if tB < B:
        while B % tB and tB > 1:                          # prefer a divisor of B
            tB -= 1
    # Guarantee >=2 grid blocks (v7x has 2 TensorCores) when there is real work.
    total_bytes = B * T * row_bytes
    n_blocks = (-(-T // tT)) * (-(-B // tB))
    if n_blocks < 2 and total_bytes >= _MIN_SPLIT_BYTES:
        if B >= 2:
            tB = (B + 1) // 2
        elif T >= 2 * sub:
            half = -(-T // 2)
            tT = (-(-half // sub)) * sub
    return tB, tT


def _choose_lane_tile(L, B, itemsize, budget):
    """Lane tile for the flattened (B, L) layout; multiple of 128 or == L."""
    per_lane = (2 * B + 1) * itemsize * 2                 # x+out (B rows) + pe, 2 buffers
    max_lanes = max(128, (budget // per_lane) // 128 * 128)
    if L <= max_lanes:
        tL = L
    else:
        tL = max_lanes
        for cand in range(tL, 127, -128):                  # prefer a divisor of L
            if L % cand == 0:
                tL = cand
                break
    if L > tL:
        return tL
    if B * L * itemsize >= _MIN_SPLIT_BYTES and L >= 256:  # force >=2 blocks (megacore)
        half = (L + 1) // 2
        tL = min(L, (-(-half // 128)) * 128)
    return tL


# --------------------------------------------------------------------------- #
# Wrapper
# --------------------------------------------------------------------------- #
def positional_encoding_forward(x, pe, *, trunc_emb=False, dropout_rate=0.1,
                                training=False, seed=0):
    """x: [B, T, D], pe: [1, max_len, D]. Returns dropout(x + pe[:, :T])."""
    B, T, D = x.shape
    p_b, max_len, Dp = pe.shape
    assert p_b == 1 and Dp == D
    if trunc_emb:
        assert T <= max_len, "seq_len must be <= max_len when trunc_emb=True"
    else:
        assert T == max_len, "without trunc_emb, seq_len must equal max_len"

    pe = pe.astype(x.dtype)
    if T < max_len:
        # Tiny parameter slice (T*D elements) so x and pe present identical
        # extents to the kernel -> identical boundary handling on tail blocks.
        pe = pe[:, :T, :]

    itemsize = jnp.dtype(x.dtype).itemsize
    budget, vmem_limit = _vmem_budgets()
    sub = _sublane_multiple(itemsize)

    # Layout choice by vreg utilisation:
    #   Path A (tB, tT, D): lanes carry D          -> util D / (128*ceil(D/128))
    #   Path B (B, tL) flat: sublanes carry B      -> util min(B,8)/8
    lane_util_a = D / (128.0 * ((D + 127) // 128))
    sublane_util_b = min(B, 8) / 8.0
    use_flat = (D % 128 != 0) and (sublane_util_b > lane_util_a)

    if not use_flat:
        # ---- Path A: (tB, tT, D) blocks; B innermost so pe's DMA is reused.
        tB, tT = _choose_tiles_3d(B, T, D, itemsize, budget, sub)
        grid = (pl.cdiv(T, tT), pl.cdiv(B, tB))
        x_spec = pl.BlockSpec((tB, tT, D), lambda t, b, *_: (b, t, 0))
        pe_spec = pl.BlockSpec((1, tT, D), lambda t, b, *_: (0, t, 0))
        o_spec = pl.BlockSpec((tB, tT, D), lambda t, b, *_: (b, t, 0))
        x_in, pe_in = x, pe
        out_struct = jax.ShapeDtypeStruct((B, T, D), x.dtype)
        dropout_kernel = functools.partial(_add_dropout_kernel_3d, T=T, D=D)
        needs_reshape = False
    else:
        # ---- Path B: lane-dense flatten to (B, T*D); full-width stores.
        L = T * D
        x_in = x.reshape(B, L)
        pe_in = pe.reshape(1, L)
        tL = _choose_lane_tile(L, B, itemsize, budget)
        grid = (pl.cdiv(L, tL),)
        x_spec = pl.BlockSpec((B, tL), lambda l, *_: (0, l))
        pe_spec = pl.BlockSpec((1, tL), lambda l, *_: (0, l))
        o_spec = pl.BlockSpec((B, tL), lambda l, *_: (0, l))
        out_struct = jax.ShapeDtypeStruct((B, L), x.dtype)
        dropout_kernel = functools.partial(_add_dropout_kernel_2d, L=L)
        needs_reshape = True

    cost = pl.CostEstimate(flops=B * T * D, transcendentals=0,
                           bytes_accessed=(2 * B * T * D + T * D) * itemsize)
    cparams = pltpu.CompilerParams(
        dimension_semantics=("parallel",) * len(grid),
        vmem_limit_bytes=vmem_limit)

    if training and dropout_rate > 0.0:
        rate = float(dropout_rate)
        assert rate < 1.0, "dropout rate must be < 1.0"
        threshold = min(int(round(rate * 2.0 ** 32)), 2 ** 32 - 1)
        kernel = functools.partial(dropout_kernel, threshold=threshold,
                                   scale=1.0 / (1.0 - rate))
        grid_spec = pltpu.PrefetchScalarGridSpec(
            num_scalar_prefetch=1, grid=grid,
            in_specs=[x_spec, pe_spec], out_specs=o_spec)
        seed_arr = jnp.asarray([seed], dtype=jnp.int32)
        out = pl.pallas_call(kernel, out_shape=out_struct, grid_spec=grid_spec,
                             compiler_params=cparams, cost_estimate=cost)(
            seed_arr, x_in, pe_in)
    else:
        grid_spec = pltpu.PrefetchScalarGridSpec(
            num_scalar_prefetch=0, grid=grid,
            in_specs=[x_spec, pe_spec], out_specs=o_spec)
        out = pl.pallas_call(_add_kernel, out_shape=out_struct,
                             grid_spec=grid_spec, compiler_params=cparams,
                             cost_estimate=cost)(x_in, pe_in)

    return out.reshape(B, T, D) if needs_reshape else out


if __name__ == "__main__":
    key = jax.random.PRNGKey(0)
    k1, k2, k3, k4, k5, k6 = jax.random.split(key, 6)

    # --- Path A (D < 128, small batch), trunc_emb=True, eval mode ------------
    B, T, D, max_len = 2, 8, 32, 16
    x = jax.random.normal(k1, (B, T, D), dtype=jnp.float32)
    pe = jax.random.truncated_normal(k2, -2.0, 2.0, (1, max_len, D), jnp.float32)
    out = jax.block_until_ready(
        positional_encoding_forward(x, pe, trunc_emb=True, training=False))
    ref = x + pe[:, :T, :]
    assert out.shape == (B, T, D)
    assert jnp.allclose(out, ref, atol=1e-6), "mismatch vs reference (trunc)"

    # --- non-truncated path (T == max_len) ------------------------------------
    x_full = jax.random.normal(k1, (B, max_len, D), dtype=jnp.float32)
    out_full = jax.block_until_ready(
        positional_encoding_forward(x_full, pe, trunc_emb=False, training=False))
    assert jnp.allclose(out_full, x_full + pe, atol=1e-6), "mismatch (full pe)"

    # --- Path B (lane-dense flatten: D % 128 != 0 and B >= 8), eval mode ------
    B2, T2, D2, ml2 = 8, 8, 32, 16
    x2 = jax.random.normal(k3, (B2, T2, D2), dtype=jnp.float32)
    pe2 = jax.random.truncated_normal(k4, -2.0, 2.0, (1, ml2, D2), jnp.float32)
    out2 = jax.block_until_ready(
        positional_encoding_forward(x2, pe2, trunc_emb=True, training=False))
    assert jnp.allclose(out2, x2 + pe2[:, :T2, :], atol=1e-6), "mismatch (path B)"

    # --- Path A, D % 128 == 0, multi-block grid (megacore split) --------------
    B3, T3, D3, ml3 = 2, 128, 128, 128
    x3 = jax.random.normal(k5, (B3, T3, D3), dtype=jnp.float32)
    pe3 = jax.random.truncated_normal(k6, -2.0, 2.0, (1, ml3, D3), jnp.float32)
    out3 = jax.block_until_ready(
        positional_encoding_forward(x3, pe3, trunc_emb=False, training=False))
    assert jnp.allclose(out3, x3 + pe3, atol=1e-6), "mismatch (multi-block)"

    # --- training-mode dropout: every element is 0 or (x+pe)/(1-p) ------------
    # TODO(synk): torch's exact nn.Dropout RNG stream is not reproducible; a
    # counter-hash PRNG with matching inverted-dropout semantics is used instead.
    rate = 0.1
    out_d = jax.block_until_ready(
        positional_encoding_forward(x, pe, trunc_emb=True, dropout_rate=rate,
                                    training=True, seed=123))
    scaled = ref / (1.0 - rate)
    is_zero = jnp.abs(out_d) <= 1e-6
    is_scaled = jnp.abs(out_d - scaled) <= 1e-4 * (1.0 + jnp.abs(scaled))
    assert bool(jnp.all(is_zero | is_scaled)), "dropout output not {0, y/(1-p)}"
    keep_frac = float(jnp.mean(1.0 - is_zero.astype(jnp.float32)))
    assert 0.7 < keep_frac < 0.995, f"dropout keep fraction off: {keep_frac}"

    print("KERNEL_OK")
</pallas_src>

<mosaic_0001>
module attributes {stable_mosaic.version = 11 : i64} {
  func.func @_add_kernel(%arg0: i32, %arg1: i32, %arg2: memref<2x8x32xf32, #tpu.memory_space<vmem>>, %arg3: memref<1x8x32xf32, #tpu.memory_space<vmem>>, %arg4: memref<2x8x32xf32, #tpu.memory_space<vmem>>) attributes {dimension_semantics = [#tpu.dimension_semantics<parallel>, #tpu.dimension_semantics<parallel>], iteration_bounds = array<i64: 1, 1>, scalar_prefetch = 0 : i64, scratch_operands = 0 : i64, tpu.core_type = #tpu.core_type<tc>, window_params = [{transform_indices = @transform_0, window_bounds = array<i64: 2, 8, 32>}, {transform_indices = @transform_1, window_bounds = array<i64: 1, 8, 32>}, {transform_indices = @transform_2, window_bounds = array<i64: 2, 8, 32>}]} {
    %c0 = arith.constant 0 : index
    %c0_0 = arith.constant 0 : index
    %c0_1 = arith.constant 0 : index
    %0 = vector.load %arg2[%c0, %c0_0, %c0_1] : memref<2x8x32xf32, #tpu.memory_space<vmem>>, vector<2x8x32xf32>
    %c0_2 = arith.constant 0 : index
    %c0_3 = arith.constant 0 : index
    %c0_4 = arith.constant 0 : index
    %1 = vector.load %arg3[%c0_2, %c0_3, %c0_4] : memref<1x8x32xf32, #tpu.memory_space<vmem>>, vector<1x8x32xf32>
    %2 = vector.broadcast %1 : vector<1x8x32xf32> to vector<2x8x32xf32>
    %3 = arith.addf %0, %2 : vector<2x8x32xf32>
    %c0_5 = arith.constant 0 : index
    %c0_6 = arith.constant 0 : index
    %c0_7 = arith.constant 0 : index
    %4 = vector.load %arg4[%c0_5, %c0_6, %c0_7] : memref<2x8x32xf32, #tpu.memory_space<vmem>>, vector<2x8x32xf32>
    tpu.vector_store %arg4[%c0_5, %c0_6, %c0_7], %3 {strides = array<i32>} : memref<2x8x32xf32, #tpu.memory_space<vmem>>, vector<2x8x32xf32>,
    return
  }
  func.func @transform_0(%arg0: i32, %arg1: i32) -> (i32, i32, i32) {
    %c0_i32 = arith.constant 0 : i32
    %c0_i32_0 = arith.constant 0 : i32
    return %arg1, %arg0, %c0_i32 : i32, i32, i32
  }
  func.func @transform_1(%arg0: i32, %arg1: i32) -> (i32, i32, i32) {
    %c0_i32 = arith.constant 0 : i32
    %c0_i32_0 = arith.constant 0 : i32
    %c0_i32_1 = arith.constant 0 : i32
    return %c0_i32, %arg0, %c0_i32_0 : i32, i32, i32
  }
  func.func @transform_2(%arg0: i32, %arg1: i32) -> (i32, i32, i32) {
    %c0_i32 = arith.constant 0 : i32
    %c0_i32_0 = arith.constant 0 : i32
    return %arg1, %arg0, %c0_i32 : i32, i32, i32
  }
}

</mosaic_0001>

<llo_original>
// kernel: tpu_custom_call.1
$region0: #{tpu_custom_call.1}
  #allocation0 [shape = 'u32[]', space=smem, size = 0x4, offset = 0x4, fixed_abs, tag = 'smem constant byte address 0x4 - core index']
  #allocation1 [shape = 'u32[144,128]{1,0:T(1,128)}', space=vmem, size = 0x12000, scoped, tag = 'internal scratch']
  %s0 = inlined_call_operand.hbm [shape: f32[2,8,32], index: 0, kind: input, shape index: {}]
  %s1 = inlined_call_operand.hbm [shape: f32[1,8,32], index: 1, kind: input, shape index: {}]
  %s2 = inlined_call_operand.hbm [shape: f32[2,8,32], index: 2, kind: output, shape index: {}]
  %s3 = sld [smem:[#allocation0]]
  $region26: #{tpu_custom_call.1} parent=0
    _
  %s5 = ssub.s32 1, %s3
  %s6 = scalar_select 0, %s5, %s3
  $region1: #{tpu_custom_call.1} parent=0
    #allocation2 [shape = 'u8[8192]{0}', space=vmem, size = 0x2000, scoped, tag = 'input window, operand 0, single buffered']
    #allocation3 [shape = 's32[1]{0}', space=sflag, size = 0x4, scoped, tag = 'scoped memory for tpu_custom_call.1']
    #allocation4 [shape = 's32[1]{0}', space=sflag, size = 0x4, scoped, tag = 'scoped memory for tpu_custom_call.1']
    #allocation5 [shape = 'u8[4096]{0}', space=vmem, size = 0x1000, scoped, tag = 'input window, operand 1, single buffered']
    #allocation6 [shape = 's32[1]{0}', space=sflag, size = 0x4, scoped, tag = 'scoped memory for tpu_custom_call.1']
    #allocation7 [shape = 'u8[8192]{0}', space=vmem, size = 0x2000, scoped, tag = 'output window, operand 0, single buffered']
    %7 = vsyncpa [#allocation3], 0
    %8 = vsyncpa [#allocation6], 0
    %9 = vsyncpa [#allocation4], 0
    // Predicated region
    $region2: #{tpu_custom_call.1} parent=1 // pred_check
      _
    $region3: #{tpu_custom_call.1} parent=1 // pred_check_branch
      %11 = sbr.rel (0) target = $region5
    $region4: #{tpu_custom_call.1} parent=1 // pred_region
      %s13 = ssub.s32 256, 256
      %14 = vsyncadd [#allocation3], %s13
      %s15 = sshll.u32 [#allocation2], 4
      %s16 = int_to_ptr.vmem [resolvable:$true] %s15
      %21 = dma.hbm_to_vmem [thread:$0]  %s0, 256, %s16, [#allocation3], 128, 128, 8
    $region5: #{tpu_custom_call.1} parent=1 // pred_fallthru
      _
    // Predicated region
    $region6: #{tpu_custom_call.1} parent=1 // pred_check
      _
    $region7: #{tpu_custom_call.1} parent=1 // pred_check_branch
      %23 = sbr.rel (0) target = $region9
    $region8: #{tpu_custom_call.1} parent=1 // pred_region
      %s25 = ssub.s32 128, 128
      %26 = vsyncadd [#allocation6], %s25
      %s28 = sshll.u32 [#allocation5], 4
      %s29 = int_to_ptr.vmem [resolvable:$true] %s28
      %31 = dma.hbm_to_vmem [thread:$0]  %s1, 128, %s29, [#allocation6]
    $region9: #{tpu_custom_call.1} parent=1 // pred_fallthru
      _
    // Predicated region
    $region10: #{tpu_custom_call.1} parent=1 // pred_check
      _
    $region11: #{tpu_custom_call.1} parent=1 // pred_check_branch
      %33 = sbr.rel (0) target = $region13
    $region12: #{tpu_custom_call.1} parent=1 // pred_region
      %34 = dma.done [#allocation3], 256
    $region13: #{tpu_custom_call.1} parent=1 // pred_fallthru
      _
    // Predicated region
    $region14: #{tpu_custom_call.1} parent=1 // pred_check
      _
    $region15: #{tpu_custom_call.1} parent=1 // pred_check_branch
      %36 = sbr.rel (0) target = $region17
    $region16: #{tpu_custom_call.1} parent=1 // pred_region
      %37 = dma.done [#allocation6], 128
    $region17: #{tpu_custom_call.1} parent=1 // pred_fallthru
      _
    %v38 = vld [vmem:[#allocation2] sm:$0xff]
    %v39 = vld [vmem:[#allocation2 + $0x8] sm:$0xff]
    %v40 = vld [vmem:[#allocation5] sm:$0xff]
    %v41 = vadd.f32 %v38, %v40
    %v42 = vadd.f32 %v39, %v40
    %vm43 = vcmask 261120
    %44 = vst.msk [vmem:[#allocation7] sm:$0xff] %vm43, %v41
    %45 = vst.msk [vmem:[#allocation7 + $0x8] sm:$0xff] %vm43, %v42
    // Predicated region
    $region18: #{tpu_custom_call.1} parent=1 // pred_check
      _
    $region19: #{tpu_custom_call.1} parent=1 // pred_check_branch
      %47 = sbr.rel (0) target = $region21
    $region20: #{tpu_custom_call.1} parent=1 // pred_region
      %s49 = ssub.s32 256, 256
      %50 = vsyncadd [#allocation4], %s49
      %s51 = sshll.u32 [#allocation7], 4
      %s52 = int_to_ptr.vmem [resolvable:$true] %s51
      %57 = dma.vmem_to_hbm [thread:$0]  %s52, 256, %s2, [#allocation4], 128, 128, 8
    $region21: #{tpu_custom_call.1} parent=1 // pred_fallthru
      _
    // Predicated region
    $region22: #{tpu_custom_call.1} parent=1 // pred_check
      _
    $region23: #{tpu_custom_call.1} parent=1 // pred_check_branch
      %59 = sbr.rel (0) target = $region25
    $region24: #{tpu_custom_call.1} parent=1 // pred_region
      %60 = dma.done [#allocation4], 256
    $region25: #{tpu_custom_call.1} parent=1 // pred_fallthru
      _
    %61 = vsyncpa [#allocation3], 1
    %62 = vsyncpa [#allocation6], 1
    %63 = vsyncpa [#allocation4], 1

</llo_original>
